<compile_context>
chip_gen: v5e
topology: v5e:2x2
jax: 0.10.0
libtpu: 0.0.40
codegen_flags: <defaults>
</compile_context>

<pallas_src>
import functools

import jax
import jax.numpy as jnp
from jax import lax
from jax.experimental import pallas as pl
from jax.experimental.pallas import tpu as pltpu


def _round_up(x: int, m: int) -> int:
    return ((x + m - 1) // m) * m


def _reward_criterion_kernel(inp_ref, seq_ref, rew_ref, out_ref, *, batch, tb, nb):
    c = pl.program_id(0)   # core-split index (parallel)
    i = pl.program_id(1)   # row-block index within this core's segment (arbitrary)

    @pl.when(i == 0)
    def _init():
        out_ref[...] = jnp.zeros_like(out_ref)

    inp = inp_ref[...].astype(jnp.float32)      # (tb, T)
    rew = rew_ref[...].astype(jnp.float32)      # (tb, T)
    seq = seq_ref[...]                          # (tb, T), any integer dtype

    T = inp.shape[1]

    # mask[:, t] = 1.0 for t == 0 else (seq[:, t-1] > 0)
    mask_raw = (seq > 0).astype(jnp.float32)
    shifted = pltpu.roll(mask_raw, shift=1, axis=1)   # wraparound col 0 overwritten below
    col = lax.broadcasted_iota(jnp.int32, (tb, T), 1)
    mask = jnp.where(col == 0, jnp.float32(1.0), shifted)

    # Zero out rows that are batch padding (they'd otherwise add 1 to den via col 0).
    row0 = (c * nb + i) * tb
    rows = row0 + lax.broadcasted_iota(jnp.int32, (tb, T), 0)
    mask = jnp.where(rows < batch, mask, jnp.float32(0.0))

    num_p = (-inp) * rew * mask                 # (tb, T)

    # Fold sublane groups of 8 rows with plain vreg adds (no cross-lane/XLU reduce).
    num_f = num_p.reshape(tb // 8, 8, T).sum(axis=0)   # (8, T)
    den_f = mask.reshape(tb // 8, 8, T).sum(axis=0)    # (8, T)

    out_ref[0, 0, :, :] += num_f
    out_ref[0, 1, :, :] += den_f


def reward_criterion(inp, seq, reward, *, num_core_splits: int = 2):
    """inp, reward: (B, T) float (any float dtype); seq: (B, T) int. Returns scalar f32."""
    B, T = inp.shape
    NC = num_core_splits

    # Row-tile size: multiple of 32 rows (safe for f32/bf16/int8 sublane tiling),
    # capped at 512 rows and by a conservative per-core VMEM budget (double-buffered
    # inputs well inside v7x's 64 MiB physical / 32 MiB scoped VMEM).
    elt_bytes = (jnp.dtype(inp.dtype).itemsize
                 + jnp.dtype(seq.dtype).itemsize
                 + jnp.dtype(reward.dtype).itemsize)
    bytes_per_row = T * elt_bytes
    vmem_budget = 8 * 1024 * 1024
    tb_cap = max(32, (vmem_budget // (2 * bytes_per_row)) // 32 * 32)

    rows_per_core = -(-B // NC)
    tb = max(32, min(512, tb_cap, _round_up(rows_per_core, 32)))
    nb = -(-rows_per_core // tb)
    b_pad = NC * nb * tb

    if b_pad != B:
        pad = ((0, b_pad - B), (0, 0))
        inp = jnp.pad(inp, pad)
        seq = jnp.pad(seq, pad)
        reward = jnp.pad(reward, pad)

    kernel = functools.partial(_reward_criterion_kernel, batch=B, tb=tb, nb=nb)

    partials = pl.pallas_call(
        kernel,
        out_shape=jax.ShapeDtypeStruct((NC, 2, 8, T), jnp.float32),
        grid=(NC, nb),
        in_specs=[
            pl.BlockSpec((tb, T), lambda c, i: (c * nb + i, 0)),
            pl.BlockSpec((tb, T), lambda c, i: (c * nb + i, 0)),
            pl.BlockSpec((tb, T), lambda c, i: (c * nb + i, 0)),
        ],
        out_specs=pl.BlockSpec((1, 2, 8, T), lambda c, i: (c, 0, 0, 0)),
        compiler_params=pltpu.CompilerParams(
            dimension_semantics=("parallel", "arbitrary"),
            vmem_limit_bytes=32 * 1024 * 1024,
        ),
    )(inp, seq, reward)

    num = jnp.sum(partials[:, 0])
    den = jnp.sum(partials[:, 1])
    return num / den     # exact divide; den >= B so never zero


def _reference(inp, seq, reward):
    mask_raw = (seq > 0).astype(jnp.float32)
    mask = jnp.concatenate(
        [jnp.ones((seq.shape[0], 1), jnp.float32), mask_raw[:, :-1]], axis=1
    )
    inp = inp.astype(jnp.float32)
    reward = reward.astype(jnp.float32)
    return jnp.sum(-inp * reward * mask) / jnp.sum(mask)


if __name__ == "__main__":
    key = jax.random.PRNGKey(0)
    k1, k2, k3 = jax.random.split(key, 3)

    B, T = 2, 8
    # "input" in the PyTorch module is gathered log-probs, shape (B, T).
    inp = jax.random.normal(k1, (B, T), dtype=jnp.float32)
    # token ids; zeros mark padding.
    seq = jax.random.randint(k2, (B, T), minval=0, maxval=5, dtype=jnp.int32)
    reward = jax.random.normal(k3, (B, T), dtype=jnp.float32)

    fn = jax.jit(reward_criterion)
    out = fn(inp, seq, reward)
    out = jax.block_until_ready(out)

    ref = _reference(inp, seq, reward)
    assert jnp.allclose(out, ref, atol=1e-5, rtol=1e-5), (out, ref)

    print("KERNEL_OK")
</pallas_src>

<mosaic_0001>
module attributes {stable_mosaic.version = 11 : i64} {
  func.func @_reward_criterion_kernel(%arg0: i32, %arg1: i32, %arg2: memref<32x8xf32, #tpu.memory_space<vmem>>, %arg3: memref<32x8xi32, #tpu.memory_space<vmem>>, %arg4: memref<32x8xf32, #tpu.memory_space<vmem>>, %arg5: memref<1x2x8x8xf32, #tpu.memory_space<vmem>>) attributes {dimension_semantics = [#tpu.dimension_semantics<parallel>, #tpu.dimension_semantics<arbitrary>], iteration_bounds = array<i64: 2, 1>, scalar_prefetch = 0 : i64, scratch_operands = 0 : i64, tpu.core_type = #tpu.core_type<tc>, window_params = [{transform_indices = @transform_0, window_bounds = array<i64: 32, 8>}, {transform_indices = @transform_1, window_bounds = array<i64: 32, 8>}, {transform_indices = @transform_2, window_bounds = array<i64: 32, 8>}, {transform_indices = @transform_3, window_bounds = array<i64: 1, 2, 8, 8>}]} {
    %c0_i32 = arith.constant 0 : i32
    %0 = arith.cmpi eq, %arg1, %c0_i32 : i32
    %1 = arith.extui %0 : i1 to i32
    %c0_i32_0 = arith.constant 0 : i32
    %2 = arith.cmpi ne, %1, %c0_i32_0 : i32
    scf.if %2 {
      %cst_28 = arith.constant 0.000000e+00 : f32
      %46 = vector.broadcast %cst_28 : f32 to vector<1x2x8x8xf32>
      %c0_29 = arith.constant 0 : index
      %c0_30 = arith.constant 0 : index
      %c0_31 = arith.constant 0 : index
      %c0_32 = arith.constant 0 : index
      %47 = vector.load %arg5[%c0_29, %c0_30, %c0_31, %c0_32] : memref<1x2x8x8xf32, #tpu.memory_space<vmem>>, vector<1x2x8x8xf32>
      tpu.vector_store %arg5[%c0_29, %c0_30, %c0_31, %c0_32], %46 {strides = array<i32>} : memref<1x2x8x8xf32, #tpu.memory_space<vmem>>, vector<1x2x8x8xf32>,
    } else {
    }
    %c0 = arith.constant 0 : index
    %c0_1 = arith.constant 0 : index
    %3 = vector.load %arg2[%c0, %c0_1] : memref<32x8xf32, #tpu.memory_space<vmem>>, vector<32x8xf32>
    %c0_2 = arith.constant 0 : index
    %c0_3 = arith.constant 0 : index
    %4 = vector.load %arg4[%c0_2, %c0_3] : memref<32x8xf32, #tpu.memory_space<vmem>>, vector<32x8xf32>
    %c0_4 = arith.constant 0 : index
    %c0_5 = arith.constant 0 : index
    %5 = vector.load %arg3[%c0_4, %c0_5] : memref<32x8xi32, #tpu.memory_space<vmem>>, vector<32x8xi32>
    %c0_i32_6 = arith.constant 0 : i32
    %6 = vector.broadcast %c0_i32_6 : i32 to vector<32x8xi32>
    %7 = arith.cmpi sgt, %5, %6 : vector<32x8xi32>
    %8 = arith.extui %7 : vector<32x8xi1> to vector<32x8xi32>
    %9 = arith.sitofp %8 : vector<32x8xi32> to vector<32x8xf32>
    %c1_i32 = arith.constant 1 : i32
    %10 = tpu.dynamic_rotate %9 by %c1_i32 dim 1 : vector<32x8xf32>, i32 -> vector<32x8xf32>
    %11 = tpu.iota {dimensions = array<i32: 1>} : vector<32x8xi32>
    %c0_i32_7 = arith.constant 0 : i32
    %12 = vector.broadcast %c0_i32_7 : i32 to vector<32x8xi32>
    %13 = arith.cmpi eq, %11, %12 : vector<32x8xi32>
    %cst = arith.constant 1.000000e+00 : f32
    %14 = vector.broadcast %cst : f32 to vector<32x8xf32>
    %15 = arith.select %13, %14, %10 : vector<32x8xi1>, vector<32x8xf32>
    %c1_i32_8 = arith.constant 1 : i32
    %16 = arith.muli %arg0, %c1_i32_8 : i32
    %17 = arith.addi %16, %arg1 : i32
    %c32_i32 = arith.constant 32 : i32
    %18 = arith.muli %17, %c32_i32 : i32
    %19 = tpu.iota {dimensions = array<i32: 0>} : vector<32x8xi32>
    %20 = vector.broadcast %18 : i32 to vector<32x8xi32>
    %21 = arith.addi %20, %19 : vector<32x8xi32>
    %c2_i32 = arith.constant 2 : i32
    %22 = vector.broadcast %c2_i32 : i32 to vector<32x8xi32>
    %23 = arith.cmpi slt, %21, %22 : vector<32x8xi32>
    %cst_9 = arith.constant 0.000000e+00 : f32
    %24 = vector.broadcast %cst_9 : f32 to vector<32x8xf32>
    %25 = arith.select %23, %15, %24 : vector<32x8xi1>, vector<32x8xf32>
    %cst_10 = arith.constant 0.000000e+00 : f32
    %26 = vector.broadcast %cst_10 : f32 to vector<32x8xf32>
    %27 = arith.subf %26, %3 : vector<32x8xf32>
    %28 = arith.mulf %27, %4 : vector<32x8xf32>
    %29 = arith.mulf %28, %25 : vector<32x8xf32>
    %30 = vector.shape_cast %29 : vector<32x8xf32> to vector<4x8x8xf32>
    %cst_11 = arith.constant dense<0.000000e+00> : vector<8x8xf32>
    %31 = vector.multi_reduction <add>, %30, %cst_11 [0] : vector<4x8x8xf32> to vector<8x8xf32>
    %32 = vector.shape_cast %25 : vector<32x8xf32> to vector<4x8x8xf32>
    %cst_12 = arith.constant dense<0.000000e+00> : vector<8x8xf32>
    %33 = vector.multi_reduction <add>, %32, %cst_12 [0] : vector<4x8x8xf32> to vector<8x8xf32>
    %c0_13 = arith.constant 0 : index
    %c0_14 = arith.constant 0 : index
    %c0_15 = arith.constant 0 : index
    %c0_16 = arith.constant 0 : index
    %34 = vector.load %arg5[%c0_13, %c0_14, %c0_15, %c0_16] : memref<1x2x8x8xf32, #tpu.memory_space<vmem>>, vector<1x1x8x8xf32>
    %35 = vector.shape_cast %34 : vector<1x1x8x8xf32> to vector<8x8xf32>
    %36 = arith.addf %35, %31 : vector<8x8xf32>
    %c0_17 = arith.constant 0 : index
    %c0_18 = arith.constant 0 : index
    %c0_19 = arith.constant 0 : index
    %c0_20 = arith.constant 0 : index
    %37 = vector.load %arg5[%c0_17, %c0_18, %c0_19, %c0_20] : memref<1x2x8x8xf32, #tpu.memory_space<vmem>>, vector<1x1x8x8xf32>
    %38 = vector.shape_cast %37 : vector<1x1x8x8xf32> to vector<8x8xf32>
    %39 = vector.shape_cast %36 : vector<8x8xf32> to vector<1x1x8x8xf32>
    tpu.vector_store %arg5[%c0_17, %c0_18, %c0_19, %c0_20], %39 {strides = array<i32>} : memref<1x2x8x8xf32, #tpu.memory_space<vmem>>, vector<1x1x8x8xf32>,
    %c0_21 = arith.constant 0 : index
    %c1 = arith.constant 1 : index
    %c0_22 = arith.constant 0 : index
    %c0_23 = arith.constant 0 : index
    %40 = vector.load %arg5[%c0_21, %c1, %c0_22, %c0_23] : memref<1x2x8x8xf32, #tpu.memory_space<vmem>>, vector<1x1x8x8xf32>
    %41 = vector.shape_cast %40 : vector<1x1x8x8xf32> to vector<8x8xf32>
    %42 = arith.addf %41, %33 : vector<8x8xf32>
    %c0_24 = arith.constant 0 : index
    %c1_25 = arith.constant 1 : index
    %c0_26 = arith.constant 0 : index
    %c0_27 = arith.constant 0 : index
    %43 = vector.load %arg5[%c0_24, %c1_25, %c0_26, %c0_27] : memref<1x2x8x8xf32, #tpu.memory_space<vmem>>, vector<1x1x8x8xf32>
    %44 = vector.shape_cast %43 : vector<1x1x8x8xf32> to vector<8x8xf32>
    %45 = vector.shape_cast %42 : vector<8x8xf32> to vector<1x1x8x8xf32>
    tpu.vector_store %arg5[%c0_24, %c1_25, %c0_26, %c0_27], %45 {strides = array<i32>} : memref<1x2x8x8xf32, #tpu.memory_space<vmem>>, vector<1x1x8x8xf32>,
    return
  }
  func.func @transform_0(%arg0: i32, %arg1: i32) -> (i32, i32) {
    %c1_i32 = arith.constant 1 : i32
    %0 = arith.muli %arg0, %c1_i32 : i32
    %1 = arith.addi %0, %arg1 : i32
    %c0_i32 = arith.constant 0 : i32
    %c0_i32_0 = arith.constant 0 : i32
    return %1, %c0_i32 : i32, i32
  }
  func.func @transform_1(%arg0: i32, %arg1: i32) -> (i32, i32) {
    %c1_i32 = arith.constant 1 : i32
    %0 = arith.muli %arg0, %c1_i32 : i32
    %1 = arith.addi %0, %arg1 : i32
    %c0_i32 = arith.constant 0 : i32
    %c0_i32_0 = arith.constant 0 : i32
    return %1, %c0_i32 : i32, i32
  }
  func.func @transform_2(%arg0: i32, %arg1: i32) -> (i32, i32) {
    %c1_i32 = arith.constant 1 : i32
    %0 = arith.muli %arg0, %c1_i32 : i32
    %1 = arith.addi %0, %arg1 : i32
    %c0_i32 = arith.constant 0 : i32
    %c0_i32_0 = arith.constant 0 : i32
    return %1, %c0_i32 : i32, i32
  }
  func.func @transform_3(%arg0: i32, %arg1: i32) -> (i32, i32, i32, i32) {
    %c0_i32 = arith.constant 0 : i32
    %c0_i32_0 = arith.constant 0 : i32
    %c0_i32_1 = arith.constant 0 : i32
    %c0_i32_2 = arith.constant 0 : i32
    return %arg0, %c0_i32, %c0_i32_0, %c0_i32_1 : i32, i32, i32, i32
  }
}

</mosaic_0001>

<llo_original>
// kernel: reward_criterion.1
$region0: #{reward_criterion.1}
  #allocation0 [shape = 'u32[]', space=smem, size = 0x4, offset = 0x4, fixed_abs, tag = 'smem constant byte address 0x4 - core index']
  #allocation1 [shape = 'u32[72,128]{1,0:T(1,128)}', space=vmem, size = 0x9000, scoped, tag = 'internal scratch']
  %s0 = inlined_call_operand.vmem [shape: f32[64,8], index: 0, kind: input, shape index: {}]
  %s1 = inlined_call_operand.vmem [shape: s32[64,8], index: 1, kind: input, shape index: {}]
  %s2 = inlined_call_operand.vmem [shape: f32[64,8], index: 2, kind: input, shape index: {}]
  %s3 = inlined_call_operand.vmem [shape: f32[2,2,8,8], index: 3, kind: output, shape index: {}]
  %s4 = sld [smem:[#allocation0]]
  $region49: #{reward_criterion.1} parent=0
    _
  %s6 = ssub.s32 1, %s4
  %s7 = scalar_select 0, %s6, %s4
  loop: start=0, step=1, limit=4
  $region2: #{reward_criterion.1} parent=0 // loop_pre_header
    _
  $region3: #{reward_criterion.1} parent=0 // loop_header
    %s9 = sphi 0, %s13
    %p10 = scmp.ge.s32.totalorder %s9, 4
    %s16 = sphi 0, %s28
    %s17 = sphi 0, %s24
    %s18 = sphi 0, %s16
    %s19 = sphi 0, %s17
    %s20 = sphi 0, %s18
    %s21 = sphi 0, %s19
    %s33 = sphi 0, %s35
    %s36 = sphi 0, %s33
    %s37 = sphi 0, %s36
    %s53 = sphi 0, %s37
    %s61 = sphi 0, %s63
    %s64 = sphi 0, %s61
    %s65 = sphi 0, %s64
    %s81 = sphi 0, %s65
    %s89 = sphi 0, %s91
    %s92 = sphi 0, %s89
    %s93 = sphi 0, %s92
    %s109 = sphi 0, %s93
    %s115 = sphi 0, %s117
    %s118 = sphi 0, %s115
    %s119 = sphi 0, %s118
    %s135 = sphi 0, %s119
  $region4: #{reward_criterion.1} parent=0 // loop_header_branch
    %12 = sbr.rel (%p10) target = $region8
  $region5: #{reward_criterion.1} parent=0 // loop_body
    %s14 = ssub.s32 %s9, 1
    %s15 = ssub.s32 %s9, 2
    %s22 = sadd.s32 1, %s17
    %p23 = scmp.ge.s32.totalorder %s22, 1
    %s24 = scalar_select %p23, 0, %s22
    %s25 = sadd.s32 1, %s16
    %s26 = scalar_select %p23, %s25, %s16
    %p27 = scmp.ge.s32.totalorder %s26, 2
    %s28 = scalar_select %p27, 0, %s26
    %s29 = sadd.s32 %s16, %s17
    %s30 = sadd.s32 %s28, %s24
    %s31 = ssub.s32 %s29, %s30
    %p32 = scmp.eq.s32.totalorder %s31, 0
    %s34 = sadd.s32 %s33, 1
    %s35 = scalar_select %p32, %s33, %s34
    %p38 = pneg %p32
    %p39 = scmp.eq.s32.totalorder %s9, 1
    %p40 = por %p38, %p39
    %p41 = scmp.ne.s32.totalorder %s33, %s36
    %p42 = scmp.eq.s32.totalorder %s9, 0
    %p43 = por %p41, %p42
    %p44 = scmp.ne.s32.totalorder %s33, %s36
    %p45 = scmp.eq.s32.totalorder %s14, 1
    %p46 = por %p44, %p45
    %p47 = scmp.ne.s32.totalorder %s36, %s37
    %p48 = scmp.eq.s32.totalorder %s14, 0
    %p49 = por %p47, %p48
    %p50 = scmp.ne.s32.totalorder %s36, %s37
    %p51 = scmp.eq.s32.totalorder %s15, 1
    %p52 = por %p50, %p51
    %p54 = scmp.ne.s32.totalorder %s37, %s53
    %p55 = scmp.eq.s32.totalorder %s15, 0
    %p56 = por %p54, %p55
    %s57 = sadd.s32 %s16, %s17
    %s58 = sadd.s32 %s28, %s24
    %s59 = ssub.s32 %s57, %s58
    %p60 = scmp.eq.s32.totalorder %s59, 0
    %s62 = sadd.s32 %s61, 1
    %s63 = scalar_select %p60, %s61, %s62
    %p66 = pneg %p60
    %p67 = scmp.eq.s32.totalorder %s9, 1
    %p68 = por %p66, %p67
    %p69 = scmp.ne.s32.totalorder %s61, %s64
    %p70 = scmp.eq.s32.totalorder %s9, 0
    %p71 = por %p69, %p70
    %p72 = scmp.ne.s32.totalorder %s61, %s64
    %p73 = scmp.eq.s32.totalorder %s14, 1
    %p74 = por %p72, %p73
    %p75 = scmp.ne.s32.totalorder %s64, %s65
    %p76 = scmp.eq.s32.totalorder %s14, 0
    %p77 = por %p75, %p76
    %p78 = scmp.ne.s32.totalorder %s64, %s65
    %p79 = scmp.eq.s32.totalorder %s15, 1
    %p80 = por %p78, %p79
    %p82 = scmp.ne.s32.totalorder %s65, %s81
    %p83 = scmp.eq.s32.totalorder %s15, 0
    %p84 = por %p82, %p83
    %s85 = sadd.s32 %s16, %s17
    %s86 = sadd.s32 %s28, %s24
    %s87 = ssub.s32 %s85, %s86
    %p88 = scmp.eq.s32.totalorder %s87, 0
    %s90 = sadd.s32 %s89, 1
    %s91 = scalar_select %p88, %s89, %s90
    %p94 = pneg %p88
    %p95 = scmp.eq.s32.totalorder %s9, 1
    %p96 = por %p94, %p95
    %p97 = scmp.ne.s32.totalorder %s89, %s92
    %p98 = scmp.eq.s32.totalorder %s9, 0
    %p99 = por %p97, %p98
    %p100 = scmp.ne.s32.totalorder %s89, %s92
    %p101 = scmp.eq.s32.totalorder %s14, 1
    %p102 = por %p100, %p101
    %p103 = scmp.ne.s32.totalorder %s92, %s93
    %p104 = scmp.eq.s32.totalorder %s14, 0
    %p105 = por %p103, %p104
    %p106 = scmp.ne.s32.totalorder %s92, %s93
    %p107 = scmp.eq.s32.totalorder %s15, 1
    %p108 = por %p106, %p107
    %p110 = scmp.ne.s32.totalorder %s93, %s109
    %p111 = scmp.eq.s32.totalorder %s15, 0
    %p112 = por %p110, %p111
    %s113 = ssub.s32 %s16, %s28
    %p114 = scmp.eq.s32.totalorder %s113, 0
    %s116 = sadd.s32 %s115, 1
    %s117 = scalar_select %p114, %s115, %s116
    %p120 = pneg %p114
    %p121 = scmp.eq.s32.totalorder %s9, 1
    %p122 = por %p120, %p121
    %p123 = scmp.ne.s32.totalorder %s115, %s118
    %p124 = scmp.eq.s32.totalorder %s9, 0
    %p125 = por %p123, %p124
    %p126 = scmp.ne.s32.totalorder %s115, %s118
    %p127 = scmp.eq.s32.totalorder %s14, 1
    %p128 = por %p126, %p127
    %p129 = scmp.ne.s32.totalorder %s118, %s119
    %p130 = scmp.eq.s32.totalorder %s14, 0
    %p131 = por %p129, %p130
    %p132 = scmp.ne.s32.totalorder %s118, %s119
    %p133 = scmp.eq.s32.totalorder %s15, 1
    %p134 = por %p132, %p133
    %p136 = scmp.ne.s32.totalorder %s119, %s135
    %p137 = scmp.eq.s32.totalorder %s15, 0
    %p138 = por %p136, %p137
    %p139 = scmp.le.s32.totalorder 1, %s9
    %p140 = scmp.lt.s32.totalorder %s9, 3
    %p141 = pnand %p139, %p140
    %p142 = pneg %p141
    // Predicated region
    $region9: #{reward_criterion.1} parent=5 // pred_check
      _
    $region10: #{reward_criterion.1} parent=5 // pred_check_branch
      %144 = sbr.rel (%p141) target = $region12
    $region11: #{reward_criterion.1} parent=5 // pred_region
      %s145 = ssub.s32 %s9, 1
    $region12: #{reward_criterion.1} parent=5 // pred_fallthru
      _
    %p146 = scmp.lt.s32.totalorder %s9, 2
    // Predicated region
    $region13: #{reward_criterion.1} parent=5 // pred_check
      %p147 = pneg %p146
    $region14: #{reward_criterion.1} parent=5 // pred_check_branch
      %149 = sbr.rel (%p147) target = $region16
    $region15: #{reward_criterion.1} parent=5 // pred_region
      // Predicated region
      $region17: #{reward_criterion.1} parent=15 // pred_check
        %p150 = pneg %p43
      $region18: #{reward_criterion.1} parent=15 // pred_check_branch
        %152 = sbr.rel (%p150) target = $region20
      $region19: #{reward_criterion.1} parent=15 // pred_region
        %s153 = sadd.s32 %s16, %s17
        %s154 = smul.u32 4, %s153
        %p155 = scmp.lt.s32.totalorder %s154, 7
        %s156 = scalar_select %p155, %s154, 7
        %s157 = smul.addr %s156, 8
        %s158 = scalar_lea.vmem %s0, %s157
        %s159 = sadd.s32 %s16, %s17
        %s160 = smul.u32 4, %s159
      $region20: #{reward_criterion.1} parent=15 // pred_fallthru
        _
      // Predicated region
      $region21: #{reward_criterion.1} parent=15 // pred_check
        %p161 = pneg %p71
      $region22: #{reward_criterion.1} parent=15 // pred_check_branch
        %163 = sbr.rel (%p161) target = $region24
      $region23: #{reward_criterion.1} parent=15 // pred_region
        %s164 = sadd.s32 %s16, %s17
        %s165 = smul.u32 4, %s164
        %p166 = scmp.lt.s32.totalorder %s165, 7
        %s167 = scalar_select %p166, %s165, 7
        %s168 = smul.addr %s167, 8
        %s169 = scalar_lea.vmem %s1, %s168
        %s170 = sadd.s32 %s16, %s17
        %s171 = smul.u32 4, %s170
      $region24: #{reward_criterion.1} parent=15 // pred_fallthru
        _
      // Predicated region
      $region25: #{reward_criterion.1} parent=15 // pred_check
        %p172 = pneg %p99
      $region26: #{reward_criterion.1} parent=15 // pred_check_branch
        %174 = sbr.rel (%p172) target = $region28
      $region27: #{reward_criterion.1} parent=15 // pred_region
        %s175 = sadd.s32 %s16, %s17
        %s176 = smul.u32 4, %s175
        %p177 = scmp.lt.s32.totalorder %s176, 7
        %s178 = scalar_select %p177, %s176, 7
        %s179 = smul.addr %s178, 8
        %s180 = scalar_lea.vmem %s2, %s179
        %s181 = sadd.s32 %s16, %s17
        %s182 = smul.u32 4, %s181
      $region28: #{reward_criterion.1} parent=15 // pred_fallthru
        _
    $region16: #{reward_criterion.1} parent=5 // pred_fallthru
      _
    %p183 = scmp.le.s32.totalorder 1, %s9
    %p184 = scmp.lt.s32.totalorder %s9, 3
    %p185 = pnand %p183, %p184
    %p186 = pneg %p185
    // Predicated region
    $region29: #{reward_criterion.1} parent=5 // pred_check
      _
    $region30: #{reward_criterion.1} parent=5 // pred_check_branch
      %188 = sbr.rel (%p185) target = $region32
    $region31: #{reward_criterion.1} parent=5 // pred_region
      %s189 = ssub.s32 %s9, 1
      %s190 = sadd.s32 %s18, %s19
      %s191 = smul.u32 4, %s190
      %p192 = scmp.lt.s32.totalorder %s191, 7
      %s193 = scalar_select %p192, %s191, 7
      %s194 = smul.addr %s193, 8
      %s195 = scalar_lea.vmem %s0, %s194
      %p196 = pneg %p49
      %p197 = pneg %p46
      %s198 = sadd.s32 %s18, %s19
      %s199 = smul.u32 4, %s198
      %p200 = scmp.lt.s32.totalorder %s199, 7
      %s201 = scalar_select %p200, %s199, 7
      %s202 = smul.addr %s201, 8
      %s203 = scalar_lea.vmem %s1, %s202
      %p204 = pneg %p77
      %p205 = pneg %p74
      %s206 = sadd.s32 %s18, %s19
      %s207 = smul.u32 4, %s206
      %p208 = scmp.lt.s32.totalorder %s207, 7
      %s209 = scalar_select %p208, %s207, 7
      %s210 = smul.addr %s209, 8
      %s211 = scalar_lea.vmem %s2, %s210
      %p212 = pneg %p105
      %p213 = pneg %p102
      %p214 = pneg %p131
      %p215 = pneg %p128
      %p216 = scmp.lt.s32.totalorder %s18, 1
      %s217 = scalar_select %p216, %s18, 1
      %s218 = smul.addr %s217, 2
      %s219 = smul.addr %s218, 8
      %s220 = scalar_lea.vmem %s3, %s219
      %s221 = sadd.s32 %s18, %s19
      %s222 = smul.u32 4, %s221
      %p223 = scmp.lt.s32.totalorder %s222, 7
      %s224 = scalar_select %p223, %s222, 7
      %s225 = smul.addr %s224, 8
      %s226 = scalar_lea.vmem %s0, %s225
      %s227 = sadd.s32 %s18, %s19
      %s228 = smul.u32 4, %s227
      %s229 = sadd.s32 %s18, %s19
      %s230 = smul.u32 4, %s229
      %p231 = scmp.lt.s32.totalorder %s230, 7
      %s232 = scalar_select %p231, %s230, 7
      %s233 = smul.addr %s232, 8
      %s234 = scalar_lea.vmem %s1, %s233
      %s235 = sadd.s32 %s18, %s19
      %s236 = smul.u32 4, %s235
      %s237 = sadd.s32 %s18, %s19
      %s238 = smul.u32 4, %s237
      %p239 = scmp.lt.s32.totalorder %s238, 7
      %s240 = scalar_select %p239, %s238, 7
      %s241 = smul.addr %s240, 8
      %s242 = scalar_lea.vmem %s2, %s241
      %s243 = sadd.s32 %s18, %s19
      %s244 = smul.u32 4, %s243
      %p245 = scmp.lt.s32.totalorder %s18, 1
      %s246 = scalar_select %p245, %s18, 1
      %s247 = smul.addr %s246, 2
      %s248 = smul.addr %s247, 8
      %s249 = scalar_lea.vmem %s3, %s248
      %p250 = scmp.eq.s32.totalorder %s19, 0
      // Predicated region
      $region33: #{reward_criterion.1} parent=31 // pred_check
        %p251 = pneg %p250
      $region34: #{reward_criterion.1} parent=31 // pred_check_branch
        %253 = sbr.rel (%p251) target = $region36
      $region35: #{reward_criterion.1} parent=31 // pred_region
        %vm254 = vcmask 64512
        %255 = vst.msk [vmem:[%s249] sm:$0xff] %vm254, 0.0
        %256 = vst.msk [vmem:[%s249 + $0x8] sm:$0xff] %vm254, 0.0
      $region36: #{reward_criterion.1} parent=31 // pred_fallthru
        _
      %v257 = vld [vmem:[%s226] sm:$0xff]
      %v258 = vld [vmem:[%s226 + $0x8] sm:$0xff]
      %v259 = vld [vmem:[%s226 + $0x10] sm:$0xff]
      %v260 = vld [vmem:[%s226 + $0x18] sm:$0xff]
      %v261 = vld [vmem:[%s242] sm:$0xff]
      %v262 = vld [vmem:[%s242 + $0x8] sm:$0xff]
      %v263 = vld [vmem:[%s242 + $0x10] sm:$0xff]
      %v264 = vld [vmem:[%s242 + $0x18] sm:$0xff]
      %v265 = vld [vmem:[%s234] sm:$0xff]
      %v266 = vld [vmem:[%s234 + $0x8] sm:$0xff]
      %v267 = vld [vmem:[%s234 + $0x10] sm:$0xff]
      %v268 = vld [vmem:[%s234 + $0x18] sm:$0xff]
      %vm269 = vcmp.gt.s32.totalorder %v265, 0
      %vm270 = vcmp.gt.s32.totalorder %v266, 0
      %vm271 = vcmp.gt.s32.totalorder %v267, 0
      %vm272 = vcmp.gt.s32.totalorder %v268, 0
      %v273 = vsel %vm269, 1, 0
      %v274 = vsel %vm270, 1, 0
      %v275 = vsel %vm271, 1, 0
      %v276 = vsel %vm272, 1, 0
      %v277 = vcvt.s32.f32 %v273
      %v278 = vcvt.s32.f32 %v274
      %v279 = vcvt.s32.f32 %v275
      %v280 = vcvt.s32.f32 %v276
      %vm281 = vcmask 1047616
      %282 = vrot.lane.b32.xlu0 %v277, 8
      %v283 = vpop.permute.xlu0 %282
      %v284 = vsel %vm281, %v283, %v277
      %285 = vrot.lane.b32.xlu0 %v278, 8
      %v286 = vpop.permute.xlu0 %285
      %v287 = vsel %vm281, %v286, %v278
      %288 = vrot.lane.b32.xlu0 %v279, 8
      %v289 = vpop.permute.xlu0 %288
      %v290 = vsel %vm281, %v289, %v279
      %291 = vrot.lane.b32.xlu0 %v280, 8
      %v292 = vpop.permute.xlu0 %291
      %v293 = vsel %vm281, %v292, %v280
      %294 = vrot.lane.b32.xlu0 %v284, 8
      %v295 = vpop.permute.xlu0 %294
      %296 = vrot.lane.b32.xlu0 %v287, 8
      %v297 = vpop.permute.xlu0 %296
      %298 = vrot.lane.b32.xlu0 %v290, 8
      %v299 = vpop.permute.xlu0 %298
      %300 = vrot.lane.b32.xlu0 %v293, 8
      %v301 = vpop.permute.xlu0 %300
      %v302 = vsel %vm281, %v295, %v277
      %v303 = vsel %vm281, %v297, %v278
      %v304 = vsel %vm281, %v299, %v279
      %v305 = vsel %vm281, %v301, %v280
      %v306 = vlaneseq
      %v307 = vand.u32 %v306, 127
      %vm308 = vcmp.eq.s32.totalorder %v307, 0
      %313 = vrot.lane.b32.xlu0 %v302, 121
      %v314 = vpop.permute.xlu0 %313
      %315 = vrot.lane.b32.xlu0 %v303, 121
      %v316 = vpop.permute.xlu0 %315
      %317 = vrot.lane.b32.xlu0 %v304, 121
      %v318 = vpop.permute.xlu0 %317
      %319 = vrot.lane.b32.xlu0 %v305, 121
      %v320 = vpop.permute.xlu0 %319
      %v325 = vsel %vm308, 1.0, %v314
      %v326 = vsel %vm308, 1.0, %v316
      %v327 = vsel %vm308, 1.0, %v318
      %v328 = vsel %vm308, 1.0, %v320
      %s329 = sadd.s32 %s18, %s19
      %s330 = smul.u32 %s329, 32
      %v331 = vlaneseq
      %v332 = vshrl.u32 %v331, 7
      %v333 = vadd.s32 %v332, 8
      %v334 = vadd.s32 %v332, 16
      %v335 = vadd.s32 %v332, 24
      %v336 = vstv %s330
      %v337 = vadd.s32 %v336, %v332
      %v338 = vadd.s32 %v336, %v333
      %v339 = vadd.s32 %v336, %v334
      %v340 = vadd.s32 %v336, %v335
      %vm341 = vcmp.lt.s32.totalorder %v337, 2
      %vm342 = vcmp.lt.s32.totalorder %v338, 2
      %vm343 = vcmp.lt.s32.totalorder %v339, 2
      %vm344 = vcmp.lt.s32.totalorder %v340, 2
      %v345 = vsel %vm341, %v325, 0.0
      %v346 = vsel %vm342, %v326, 0.0
      %v347 = vsel %vm343, %v327, 0.0
      %v348 = vsel %vm344, %v328, 0.0
      %v349 = vsub.f32 0.0, %v257
      %v350 = vsub.f32 0.0, %v258
      %v351 = vsub.f32 0.0, %v259
      %v352 = vsub.f32 0.0, %v260
      %v353 = vmul.f32 %v349, %v261
      %v354 = vmul.f32 %v350, %v262
      %v355 = vmul.f32 %v351, %v263
      %v356 = vmul.f32 %v352, %v264
      %v357 = vmul.f32 %v353, %v345
      %v358 = vmul.f32 %v354, %v346
      %v359 = vmul.f32 %v355, %v347
      %v360 = vmul.f32 %v356, %v348
      %vm361 = vcmask 64512
      %v362 = vsel %vm361, %v357, 0.0
      %v363 = vsel %vm361, %v358, 0.0
      %v364 = vadd.f32 %v362, %v363
      %v365 = vsel %vm361, %v359, 0.0
      %v366 = vadd.f32 %v364, %v365
      %v367 = vsel %vm361, %v360, 0.0
      %v368 = vadd.f32 %v366, %v367
      %v369 = vsel %vm361, %v345, 0.0
      %v370 = vsel %vm361, %v346, 0.0
      %v371 = vadd.f32 %v369, %v370
      %v372 = vsel %vm361, %v347, 0.0
      %v373 = vadd.f32 %v371, %v372
      %v374 = vsel %vm361, %v348, 0.0
      %v375 = vadd.f32 %v373, %v374
      %v376 = vld [vmem:[%s249] sm:$0xff]
      %v377 = vadd.f32 %v376, %v368
      %378 = vst.msk [vmem:[%s249] sm:$0xff] %vm361, %v377
      %s379 = scalar_lea.vmem %s249, 8
      %v380 = vld [vmem:[%s379] sm:$0xff]
      %v381 = vadd.f32 %v380, %v375
      %382 = vst.msk [vmem:[%s379] sm:$0xff] %vm361, %v381
      %p383 = scmp.lt.s32.totalorder %s18, 1
      %s384 = scalar_select %p383, %s18, 1
      %s385 = smul.addr %s384, 2
      %s386 = smul.addr %s385, 8
      %s387 = scalar_lea.vmem %s3, %s386
      // Predicated region
      $region37: #{reward_criterion.1} parent=31 // pred_check
        %p388 = pneg %p128
      $region38: #{reward_criterion.1} parent=31 // pred_check_branch
        %390 = sbr.rel (%p388) target = $region40
      $region39: #{reward_criterion.1} parent=31 // pred_region
        _
      $region40: #{reward_criterion.1} parent=31 // pred_fallthru
        _
    $region32: #{reward_criterion.1} parent=5 // pred_fallthru
      _
    %p391 = scmp.le.s32.totalorder 2, %s9
    // Predicated region
    $region41: #{reward_criterion.1} parent=5 // pred_check
      %p392 = pneg %p391
    $region42: #{reward_criterion.1} parent=5 // pred_check_branch
      %394 = sbr.rel (%p392) target = $region44
    $region43: #{reward_criterion.1} parent=5 // pred_region
      %s395 = ssub.s32 %s9, 2
      // Predicated region
      $region45: #{reward_criterion.1} parent=43 // pred_check
        %p396 = pneg %p134
      $region46: #{reward_criterion.1} parent=43 // pred_check_branch
        %398 = sbr.rel (%p396) target = $region48
      $region47: #{reward_criterion.1} parent=43 // pred_region
        %p399 = scmp.lt.s32.totalorder %s20, 1
        %s400 = scalar_select %p399, %s20, 1
        %s401 = smul.addr %s400, 2
        %s402 = smul.addr %s401, 8
        %s403 = scalar_lea.vmem %s3, %s402
      $region48: #{reward_criterion.1} parent=43 // pred_fallthru
        _
    $region44: #{reward_criterion.1} parent=5 // pred_fallthru
      _
  $region6: #{reward_criterion.1} parent=0 // loop_footer
    %s13 = sadd.s32 1, %s9
  $region7: #{reward_criterion.1} parent=0 // loop_footer_branch
    %8 = sbr.rel target = $region3
  $region8: #{reward_criterion.1} parent=0 // loop_exit
    _

</llo_original>
